<compile_context>
chip_gen: v6e
topology: v6e:2x2x1
jax: 0.10.0
libtpu: 0.0.40
codegen_flags: <defaults>
</compile_context>

<pallas_src>
import functools

import jax
import jax.numpy as jnp
from jax.experimental import pallas as pl
from jax.experimental.pallas import tpu as pltpu

D_IN = 2      # nn.Linear(2, 50)
D_HID = 50
D_OUT = 2     # nn.Linear(50, 2)


def odefunc_kernel(y_ref, w1t_ref, b1_ref, w2t_ref, b2_ref, o_ref, *,
                   layer1_on_mxu: bool = False):
    # y_ref:   (D_IN, tn)       batch tile, batch on lanes
    # w1t_ref: (D_HID, D_IN)  = (50, 2)
    # b1_ref:  (D_HID, 1)
    # w2t_ref: (D_OUT, D_HID) = (2, 50)
    # b2_ref:  (D_OUT, 1)
    # o_ref:   (D_OUT, tn)
    y = y_ref[...]                                   # (2, tn)
    y3 = y * y * y                                   # y ** 3, lane-dense VPU

    if layer1_on_mxu:
        # K=2 contraction on the (otherwise idle) MXU; profile-first option.
        h = jnp.dot(w1t_ref[...], y3,
                    preferred_element_type=jnp.float32) + b1_ref[...]
    else:
        # K=2 contraction as two broadcast VPU FMAs (kernel is EUP-bound, so
        # the VALU has slack for this).
        w1t = w1t_ref[...]                           # (50, 2)
        h = (w1t[:, 0:1] * y3[0:1, :]                # (50,1)*(1,tn) -> (50,tn)
             + w1t[:, 1:2] * y3[1:2, :]
             + b1_ref[...])                          # (50, 1) bias column
    h = jnp.tanh(h)                                  # EUP, lane-dense

    # Second layer: (2,50) @ (50,tn) on the MXU, f32 accumulate.
    o = jnp.dot(w2t_ref[...], h,
                preferred_element_type=jnp.float32) + b2_ref[...]
    o_ref[...] = o.astype(o_ref.dtype)               # lane-dense store


def _round_up(n, m):
    return pl.cdiv(n, m) * m


def _choose_lane_tile(n, max_tile):
    """Lane tile: multiple of 128, <= max_tile, megacore- and padding-aware."""
    n128 = int(_round_up(n, 128))
    num_tiles = int(pl.cdiv(n128, max_tile))
    if n128 >= 256:
        # v7x megacore: need >= 2 parallel grid steps to use both TensorCores.
        num_tiles = max(num_tiles, 2)
    tn = int(_round_up(pl.cdiv(n128, num_tiles), 128))
    return tn


def ode_func_dn(y_t, w1, b1, w2, b2, *, max_tile=512, layer1_on_mxu=False):
    """ODEFunc forward in the transpose-free (D, N) layout.

    Args:
      y_t: (D_IN, N) float32 — batch of ODE states, batch on the last axis.
      w1: (D_IN, D_HID), b1: (D_HID,), w2: (D_HID, D_OUT), b2: (D_OUT,)
    Returns:
      (D_OUT, N) float32.
    """
    d_in, N = y_t.shape
    assert d_in == D_IN

    w1t = w1.T                                 # (D_HID, D_IN)   tiny
    w2t = w2.T                                 # (D_OUT, D_HID)  tiny
    b1c = b1.reshape(D_HID, 1)
    b2c = b2.reshape(D_OUT, 1)

    tn = _choose_lane_tile(N, max_tile)
    n_pad = int(_round_up(N, tn))
    if n_pad != N:
        # Zero-pad the lane axis; padded columns are finite (tanh(b1)W2+b2)
        # and sliced off below.
        y_t = jnp.pad(y_t, ((0, 0), (0, n_pad - N)))
    grid = (n_pad // tn,)

    cost = pl.CostEstimate(
        flops=(2 * N * D_IN                            # y**3 (2 muls/elem)
               + 2 * N * D_IN * D_HID + N * D_HID      # layer 1 + bias
               + 2 * N * D_HID * D_OUT + N * D_OUT),   # layer 2 + bias
        transcendentals=N * D_HID,                     # tanh
        bytes_accessed=4 * (N * (D_IN + D_OUT)
                            + D_IN * D_HID + D_HID
                            + D_HID * D_OUT + D_OUT),
    )

    kernel = functools.partial(odefunc_kernel, layer1_on_mxu=layer1_on_mxu)
    out_t = pl.pallas_call(
        kernel,
        out_shape=jax.ShapeDtypeStruct((D_OUT, n_pad), y_t.dtype),
        grid_spec=pl.GridSpec(
            grid=grid,
            in_specs=[
                pl.BlockSpec((D_IN, tn), lambda i: (0, i)),      # y tile
                pl.BlockSpec((D_HID, D_IN), lambda i: (0, 0)),   # W1^T (bcast)
                pl.BlockSpec((D_HID, 1), lambda i: (0, 0)),      # b1 column
                pl.BlockSpec((D_OUT, D_HID), lambda i: (0, 0)),  # W2^T (bcast)
                pl.BlockSpec((D_OUT, 1), lambda i: (0, 0)),      # b2 column
            ],
            out_specs=pl.BlockSpec((D_OUT, tn), lambda i: (0, i)),
        ),
        compiler_params=pltpu.CompilerParams(
            dimension_semantics=("parallel",)),
        cost_estimate=cost,
    )(y_t, w1t, b1c, w2t, b2c)

    return out_t[:, :N]


def ode_func(y, w1, b1, w2, b2, **kwargs):
    """Module-contract entry point: y (N, D_IN) -> (N, D_OUT).

    The tiny (N,2)<->(2,N) transposes happen once here; solver loops should
    call ode_func_dn directly and keep the (D, N) layout resident.
    """
    N, d_in = y.shape
    assert d_in == D_IN
    return ode_func_dn(y.T, w1, b1, w2, b2, **kwargs).T


def init_params(key):
    """Deterministic PyTorch-style init: U(-1/sqrt(fan_in), 1/sqrt(fan_in))."""
    k1, k2, k3, k4 = jax.random.split(key, 4)
    bound1 = 1.0 / jnp.sqrt(jnp.float32(D_IN))
    bound2 = 1.0 / jnp.sqrt(jnp.float32(D_HID))
    w1 = jax.random.uniform(k1, (D_IN, D_HID), jnp.float32, -bound1, bound1)
    b1 = jax.random.uniform(k2, (D_HID,), jnp.float32, -bound1, bound1)
    w2 = jax.random.uniform(k3, (D_HID, D_OUT), jnp.float32, -bound2, bound2)
    b2 = jax.random.uniform(k4, (D_OUT,), jnp.float32, -bound2, bound2)
    return w1, b1, w2, b2


if __name__ == "__main__":
    key = jax.random.PRNGKey(0)
    kp, ky1, ky2 = jax.random.split(key, 3)
    w1, b1, w2, b2 = init_params(kp)

    t = jnp.float32(0.0)    # unused by ODEFunc.forward; kept for parity

    # Case 1: demo-scale batch (grid = 1 tile).
    N1 = 128
    y1 = jax.random.normal(ky1, (N1, D_IN), jnp.float32)
    out1 = jax.block_until_ready(ode_func(y1, w1, b1, w2, b2))
    ref1 = jnp.tanh((y1 ** 3) @ w1 + b1) @ w2 + b2
    assert out1.shape == (N1, D_OUT)
    assert jnp.allclose(out1, ref1, atol=1e-5, rtol=1e-5)

    # Case 2: ragged batch (exercises padding + >=2 parallel grid steps).
    N2 = 300
    y2 = jax.random.normal(ky2, (N2, D_IN), jnp.float32)
    out2 = jax.block_until_ready(ode_func(y2, w1, b1, w2, b2))
    ref2 = jnp.tanh((y2 ** 3) @ w1 + b1) @ w2 + b2
    assert out2.shape == (N2, D_OUT)
    assert jnp.allclose(out2, ref2, atol=1e-5, rtol=1e-5)

    print("KERNEL_OK")
</pallas_src>

<mosaic_0001>
module attributes {stable_mosaic.version = 11 : i64} {
  func.func @odefunc_kernel(%arg0: i32, %arg1: memref<2x128xf32, #tpu.memory_space<vmem>>, %arg2: memref<50x2xf32, #tpu.memory_space<vmem>>, %arg3: memref<50x1xf32, #tpu.memory_space<vmem>>, %arg4: memref<2x50xf32, #tpu.memory_space<vmem>>, %arg5: memref<2x1xf32, #tpu.memory_space<vmem>>, %arg6: memref<2x128xf32, #tpu.memory_space<vmem>>) attributes {dimension_semantics = [#tpu.dimension_semantics<parallel>], iteration_bounds = array<i64: 1>, scalar_prefetch = 0 : i64, scratch_operands = 0 : i64, tpu.core_type = #tpu.core_type<tc>, window_params = [{transform_indices = @transform_0, window_bounds = array<i64: 2, 128>}, {pipeline_mode = #tpu.pipeline_mode<synchronous>, transform_indices = @transform_1, window_bounds = array<i64: 50, 2>}, {pipeline_mode = #tpu.pipeline_mode<synchronous>, transform_indices = @transform_2, window_bounds = array<i64: 50, 1>}, {pipeline_mode = #tpu.pipeline_mode<synchronous>, transform_indices = @transform_3, window_bounds = array<i64: 2, 50>}, {pipeline_mode = #tpu.pipeline_mode<synchronous>, transform_indices = @transform_4, window_bounds = array<i64: 2, 1>}, {transform_indices = @transform_5, window_bounds = array<i64: 2, 128>}]} {
    %c0 = arith.constant 0 : index
    %c0_0 = arith.constant 0 : index
    %0 = vector.load %arg1[%c0, %c0_0] : memref<2x128xf32, #tpu.memory_space<vmem>>, vector<2x128xf32>
    %1 = arith.mulf %0, %0 : vector<2x128xf32>
    %2 = arith.mulf %1, %0 : vector<2x128xf32>
    %c0_1 = arith.constant 0 : index
    %c0_2 = arith.constant 0 : index
    %3 = vector.load %arg2[%c0_1, %c0_2] : memref<50x2xf32, #tpu.memory_space<vmem>>, vector<50x2xf32>
    %4 = vector.extract_strided_slice %3 {offsets = [0, 0], sizes = [50, 1], strides = [1, 1]} : vector<50x2xf32> to vector<50x1xf32>
    %5 = vector.extract_strided_slice %2 {offsets = [0, 0], sizes = [1, 128], strides = [1, 1]} : vector<2x128xf32> to vector<1x128xf32>
    %6 = vector.broadcast %4 : vector<50x1xf32> to vector<50x128xf32>
    %7 = vector.broadcast %5 : vector<1x128xf32> to vector<50x128xf32>
    %8 = arith.mulf %6, %7 : vector<50x128xf32>
    %9 = vector.extract_strided_slice %3 {offsets = [0, 1], sizes = [50, 1], strides = [1, 1]} : vector<50x2xf32> to vector<50x1xf32>
    %10 = vector.extract_strided_slice %2 {offsets = [1, 0], sizes = [1, 128], strides = [1, 1]} : vector<2x128xf32> to vector<1x128xf32>
    %11 = vector.broadcast %9 : vector<50x1xf32> to vector<50x128xf32>
    %12 = vector.broadcast %10 : vector<1x128xf32> to vector<50x128xf32>
    %13 = arith.mulf %11, %12 : vector<50x128xf32>
    %14 = arith.addf %8, %13 : vector<50x128xf32>
    %c0_3 = arith.constant 0 : index
    %c0_4 = arith.constant 0 : index
    %15 = vector.load %arg3[%c0_3, %c0_4] : memref<50x1xf32, #tpu.memory_space<vmem>>, vector<50x1xf32>
    %16 = vector.broadcast %15 : vector<50x1xf32> to vector<50x128xf32>
    %17 = arith.addf %14, %16 : vector<50x128xf32>
    %18 = math.tanh %17 : vector<50x128xf32>
    %c0_5 = arith.constant 0 : index
    %c0_6 = arith.constant 0 : index
    %19 = vector.load %arg4[%c0_5, %c0_6] : memref<2x50xf32, #tpu.memory_space<vmem>>, vector<2x50xf32>
    %cst = arith.constant dense<0.000000e+00> : vector<2x128xf32>
    %20 = tpu.matmul %19, %18, %cst {dimension_numbers = #tpu.dot_dimension_numbers<[1], [0], [0], [1], [0, 0, 1, 1], [], []>} : vector<2x50xf32>, vector<50x128xf32>, vector<2x128xf32> -> vector<2x128xf32>
    %c0_7 = arith.constant 0 : index
    %c0_8 = arith.constant 0 : index
    %21 = vector.load %arg5[%c0_7, %c0_8] : memref<2x1xf32, #tpu.memory_space<vmem>>, vector<2x1xf32>
    %22 = vector.broadcast %21 : vector<2x1xf32> to vector<2x128xf32>
    %23 = arith.addf %20, %22 : vector<2x128xf32>
    %c0_9 = arith.constant 0 : index
    %c0_10 = arith.constant 0 : index
    %24 = vector.load %arg6[%c0_9, %c0_10] : memref<2x128xf32, #tpu.memory_space<vmem>>, vector<2x128xf32>
    tpu.vector_store %arg6[%c0_9, %c0_10], %23 {strides = array<i32>} : memref<2x128xf32, #tpu.memory_space<vmem>>, vector<2x128xf32>,
    return
  }
  func.func @transform_0(%arg0: i32) -> (i32, i32) {
    %c0_i32 = arith.constant 0 : i32
    %c0_i32_0 = arith.constant 0 : i32
    return %c0_i32, %arg0 : i32, i32
  }
  func.func @transform_1(%arg0: i32) -> (i32, i32) {
    %c0_i32 = arith.constant 0 : i32
    %c0_i32_0 = arith.constant 0 : i32
    %c0_i32_1 = arith.constant 0 : i32
    return %c0_i32, %c0_i32_0 : i32, i32
  }
  func.func @transform_2(%arg0: i32) -> (i32, i32) {
    %c0_i32 = arith.constant 0 : i32
    %c0_i32_0 = arith.constant 0 : i32
    %c0_i32_1 = arith.constant 0 : i32
    return %c0_i32, %c0_i32_0 : i32, i32
  }
  func.func @transform_3(%arg0: i32) -> (i32, i32) {
    %c0_i32 = arith.constant 0 : i32
    %c0_i32_0 = arith.constant 0 : i32
    %c0_i32_1 = arith.constant 0 : i32
    return %c0_i32, %c0_i32_0 : i32, i32
  }
  func.func @transform_4(%arg0: i32) -> (i32, i32) {
    %c0_i32 = arith.constant 0 : i32
    %c0_i32_0 = arith.constant 0 : i32
    %c0_i32_1 = arith.constant 0 : i32
    return %c0_i32, %c0_i32_0 : i32, i32
  }
  func.func @transform_5(%arg0: i32) -> (i32, i32) {
    %c0_i32 = arith.constant 0 : i32
    %c0_i32_0 = arith.constant 0 : i32
    return %c0_i32, %arg0 : i32, i32
  }
}

</mosaic_0001>

<llo_original>
// kernel: tpu_custom_call.1
$region0: #{tpu_custom_call.1}
  #allocation0 [shape = 'u32[]', space=smem, size = 0x4, offset = 0x4, fixed_abs, tag = 'smem constant byte address 0x4 - core index']
  #allocation1 [shape = 'u32[144,128]{1,0:T(1,128)}', space=vmem, size = 0x12000, scoped, tag = 'internal scratch']
  %s0 = inlined_call_operand.vmem [shape: f32[2,128], index: 0, kind: input, shape index: {}]
  %s1 = inlined_call_operand.vmem [shape: f32[50,2], index: 1, kind: input, shape index: {}]
  %s2 = inlined_call_operand.vmem [shape: f32[50,1], index: 2, kind: input, shape index: {}]
  %s3 = inlined_call_operand.vmem [shape: f32[2,50], index: 3, kind: input, shape index: {}]
  %s4 = inlined_call_operand.vmem [shape: f32[2,1], index: 4, kind: input, shape index: {}]
  %s5 = inlined_call_operand.hbm [shape: f32[2,128], index: 5, kind: output, shape index: {}]
  %s6 = sld [smem:[#allocation0]]
  $region30: #{tpu_custom_call.1} parent=0
    _
  %s8 = ssub.s32 1, %s6
  %s9 = scalar_select 0, %s8, %s6
  $region1: #{tpu_custom_call.1} parent=0
    #allocation2 [shape = 'u8[1024]{0}', space=vmem, size = 0x400, scoped, tag = 'output window, operand 0, single buffered']
    #allocation3 [shape = 's32[1]{0}', space=sflag, size = 0x4, scoped, tag = 'scoped memory for tpu_custom_call.1']
    %10 = vsyncpa [#allocation3], 0
    // Predicated region
    $region2: #{tpu_custom_call.1} parent=1 // pred_check
      _
    $region3: #{tpu_custom_call.1} parent=1 // pred_check_branch
      %12 = sbr.rel (0) target = $region5
    $region4: #{tpu_custom_call.1} parent=1 // pred_region
      _
    $region5: #{tpu_custom_call.1} parent=1 // pred_fallthru
      _
    // Predicated region
    $region6: #{tpu_custom_call.1} parent=1 // pred_check
      _
    $region7: #{tpu_custom_call.1} parent=1 // pred_check_branch
      %14 = sbr.rel (0) target = $region9
    $region8: #{tpu_custom_call.1} parent=1 // pred_region
      _
    $region9: #{tpu_custom_call.1} parent=1 // pred_fallthru
      _
    // Predicated region
    $region10: #{tpu_custom_call.1} parent=1 // pred_check
      _
    $region11: #{tpu_custom_call.1} parent=1 // pred_check_branch
      %16 = sbr.rel (0) target = $region13
    $region12: #{tpu_custom_call.1} parent=1 // pred_region
      _
    $region13: #{tpu_custom_call.1} parent=1 // pred_fallthru
      _
    // Predicated region
    $region14: #{tpu_custom_call.1} parent=1 // pred_check
      _
    $region15: #{tpu_custom_call.1} parent=1 // pred_check_branch
      %18 = sbr.rel (0) target = $region17
    $region16: #{tpu_custom_call.1} parent=1 // pred_region
      _
    $region17: #{tpu_custom_call.1} parent=1 // pred_fallthru
      _
    // Predicated region
    $region18: #{tpu_custom_call.1} parent=1 // pred_check
      _
    $region19: #{tpu_custom_call.1} parent=1 // pred_check_branch
      %20 = sbr.rel (0) target = $region21
    $region20: #{tpu_custom_call.1} parent=1 // pred_region
      _
    $region21: #{tpu_custom_call.1} parent=1 // pred_fallthru
      _
    %v21 = vld [vmem:[%s0] sm:$0x3]
    %v22 = vmul.f32 %v21, %v21
    %v23 = vmul.f32 %v22, %v21
    %v24 = vld [vmem:[%s1] sm:$0xff]
    %v25 = vld [vmem:[%s1 + $0x8] sm:$0xff]
    %v26 = vld [vmem:[%s1 + $0x10] sm:$0xff]
    %v27 = vld [vmem:[%s1 + $0x18] sm:$0xff]
    %v28 = vld [vmem:[%s1 + $0x20] sm:$0xff]
    %v29 = vld [vmem:[%s1 + $0x28] sm:$0xff]
    %v30 = vld [vmem:[%s1 + $0x30] sm:$0x3]
    %32 = vset.pattern.permute.xlu0 0
    %33 = vperm.xlu0 %32, %v24
    %v34 = vpop.permute.xlu0 %33
    %37 = vset.pattern.permute.xlu0 0
    %38 = vperm.xlu0 %37, %v25
    %v39 = vpop.permute.xlu0 %38
    %42 = vset.pattern.permute.xlu0 0
    %43 = vperm.xlu0 %42, %v26
    %v44 = vpop.permute.xlu0 %43
    %47 = vset.pattern.permute.xlu0 0
    %48 = vperm.xlu0 %47, %v27
    %v49 = vpop.permute.xlu0 %48
    %52 = vset.pattern.permute.xlu0 0
    %53 = vperm.xlu0 %52, %v28
    %v54 = vpop.permute.xlu0 %53
    %57 = vset.pattern.permute.xlu0 0
    %58 = vperm.xlu0 %57, %v29
    %v59 = vpop.permute.xlu0 %58
    %62 = vset.pattern.permute.xlu0 0
    %63 = vperm.xlu0 %62, %v30
    %v64 = vpop.permute.xlu0 %63
    %v66 = vlaneseq
    %v67 = vshrl.u32 %v66, 7
    %v68 = vsub.s32 0, %v67
    %v69 = vrot.slane %v23, %v68
    %v70 = vmul.f32 %v34, %v69
    %v71 = vmul.f32 %v39, %v69
    %v72 = vmul.f32 %v44, %v69
    %v73 = vmul.f32 %v49, %v69
    %v74 = vmul.f32 %v54, %v69
    %v75 = vmul.f32 %v59, %v69
    %v76 = vmul.f32 %v64, %v69
    %77 = vset.pattern.permute.xlu0 1
    %78 = vperm.xlu0 %77, %v24
    %v79 = vpop.permute.xlu0 %78
    %81 = vset.pattern.permute.xlu0 1
    %82 = vperm.xlu0 %81, %v25
    %v83 = vpop.permute.xlu0 %82
    %85 = vset.pattern.permute.xlu0 1
    %86 = vperm.xlu0 %85, %v26
    %v87 = vpop.permute.xlu0 %86
    %89 = vset.pattern.permute.xlu0 1
    %90 = vperm.xlu0 %89, %v27
    %v91 = vpop.permute.xlu0 %90
    %93 = vset.pattern.permute.xlu0 1
    %94 = vperm.xlu0 %93, %v28
    %v95 = vpop.permute.xlu0 %94
    %97 = vset.pattern.permute.xlu0 1
    %98 = vperm.xlu0 %97, %v29
    %v99 = vpop.permute.xlu0 %98
    %101 = vset.pattern.permute.xlu0 1
    %102 = vperm.xlu0 %101, %v30
    %v103 = vpop.permute.xlu0 %102
    %v105 = vlaneseq
    %v106 = vshrl.u32 %v105, 7
    %v107 = vsub.s32 1, %v106
    %v108 = vrot.slane %v23, %v107
    %v109 = vmul.f32 %v79, %v108
    %v110 = vmul.f32 %v83, %v108
    %v111 = vmul.f32 %v87, %v108
    %v112 = vmul.f32 %v91, %v108
    %v113 = vmul.f32 %v95, %v108
    %v114 = vmul.f32 %v99, %v108
    %v115 = vmul.f32 %v103, %v108
    %v116 = vadd.f32 %v70, %v109
    %v117 = vadd.f32 %v71, %v110
    %v118 = vadd.f32 %v72, %v111
    %v119 = vadd.f32 %v73, %v112
    %v120 = vadd.f32 %v74, %v113
    %v121 = vadd.f32 %v75, %v114
    %v122 = vadd.f32 %v76, %v115
    %v123 = vld [vmem:[%s2] sm:$0xff]
    %v124 = vld [vmem:[%s2 + $0x8] sm:$0xff]
    %v125 = vld [vmem:[%s2 + $0x10] sm:$0xff]
    %v126 = vld [vmem:[%s2 + $0x18] sm:$0xff]
    %v127 = vld [vmem:[%s2 + $0x20] sm:$0xff]
    %v128 = vld [vmem:[%s2 + $0x28] sm:$0xff]
    %v129 = vld [vmem:[%s2 + $0x30] sm:$0x3]
    %131 = vset.pattern.permute.xlu0 0
    %132 = vperm.xlu0 %131, %v123
    %v133 = vpop.permute.xlu0 %132
    %136 = vset.pattern.permute.xlu0 0
    %137 = vperm.xlu0 %136, %v124
    %v138 = vpop.permute.xlu0 %137
    %141 = vset.pattern.permute.xlu0 0
    %142 = vperm.xlu0 %141, %v125
    %v143 = vpop.permute.xlu0 %142
    %146 = vset.pattern.permute.xlu0 0
    %147 = vperm.xlu0 %146, %v126
    %v148 = vpop.permute.xlu0 %147
    %151 = vset.pattern.permute.xlu0 0
    %152 = vperm.xlu0 %151, %v127
    %v153 = vpop.permute.xlu0 %152
    %156 = vset.pattern.permute.xlu0 0
    %157 = vperm.xlu0 %156, %v128
    %v158 = vpop.permute.xlu0 %157
    %161 = vset.pattern.permute.xlu0 0
    %162 = vperm.xlu0 %161, %v129
    %v163 = vpop.permute.xlu0 %162
    %v165 = vadd.f32 %v116, %v133
    %v166 = vadd.f32 %v117, %v138
    %v167 = vadd.f32 %v118, %v143
    %v168 = vadd.f32 %v119, %v148
    %v169 = vadd.f32 %v120, %v153
    %v170 = vadd.f32 %v121, %v158
    %v171 = vadd.f32 %v122, %v163
    %v172 = vtanh.pop %v165
    %v173 = vtanh.pop %v166
    %v174 = vtanh.pop %v167
    %v175 = vtanh.pop %v168
    %v176 = vtanh.pop %v169
    %v177 = vtanh.pop %v170
    %v178 = vtanh.pop %v171
    %v179 = vld [vmem:[%s3] sm:$0x3]
    %v180 = vld [vmem:[%s4] sm:$0x3]
    %182 = vset.pattern.permute.xlu0 0
    %183 = vperm.xlu0 %182, %v180
    %v184 = vpop.permute.xlu0 %183
    %vm186 = vcmask 408576
    %v188 = vsel %vm186, %v179, 0
    %vm190 = vcmask 1041408
    %v192 = vsel %vm190, %v178, 0
    %194 = vmatprep.subr.mxu0 0.0
    %195 = vmatpush1.msra.mxu0 0.0
    %196 = vmatprep.subr.mxu0 0.0
    %197 = vmatpush1.msra.mxu0 0.0
    %198 = vmatprep.subr.mxu0 0.0
    %199 = vmatpush1.msra.mxu0 0.0
    %200 = vmatprep.subr.mxu0 0.0
    %201 = vmatpush1.msra.mxu0 0.0
    %202 = vmatprep.subr.mxu0 0.0
    %203 = vmatpush1.msra.mxu0 0.0
    %204 = vmatprep.subr.mxu0 0.0
    %205 = vmatpush1.msra.mxu0 0.0
    %206 = vmatprep.subr.mxu0 0.0
    %207 = vmatpush1.msra.mxu0 0.0
    %208 = vmatprep.subr.mxu0 0.0
    %209 = vmatpush1.msra.mxu0 0.0
    %210 = vmatprep.subr.mxu0 0.0
    %211 = vmatpush1.msra.mxu0 0.0
    %212 = vmatprep.subr.mxu0 0.0
    %213 = vmatpush1.msra.mxu0 %v192
    %214 = vmatprep.subr.mxu0 0.0
    %215 = vmatpush1.msra.mxu0 %v177
    %216 = vmatprep.subr.mxu0 0.0
    %217 = vmatpush1.msra.mxu0 %v176
    %218 = vmatprep.subr.mxu0 0.0
    %219 = vmatpush1.msra.mxu0 %v175
    %220 = vmatprep.subr.mxu0 0.0
    %221 = vmatpush1.msra.mxu0 %v174
    %222 = vmatprep.subr.mxu0 0.0
    %223 = vmatpush1.msra.mxu0 %v173
    %224 = vmatprep.subr.mxu0 0.0
    %225 = vmatpush1.msra.mxu0 %v172
    %226 = vmatprep.subr.mxu0 0.0
    %227 = vmatpush2.msra.mxu0 0.0
    %228 = vmatprep.subr.mxu0 0.0
    %229 = vmatpush2.msra.mxu0 0.0
    %230 = vmatprep.subr.mxu0 0.0
    %231 = vmatpush2.msra.mxu0 0.0
    %232 = vmatprep.subr.mxu0 0.0
    %233 = vmatpush2.msra.mxu0 0.0
    %234 = vmatprep.subr.mxu0 0.0
    %235 = vmatpush2.msra.mxu0 0.0
    %236 = vmatprep.subr.mxu0 0.0
    %237 = vmatpush2.msra.mxu0 0.0
    %238 = vmatprep.subr.mxu0 0.0
    %239 = vmatpush2.msra.mxu0 0.0
    %240 = vmatprep.subr.mxu0 0.0
    %241 = vmatpush2.msra.mxu0 0.0
    %242 = vmatprep.subr.mxu0 0.0
    %243 = vmatpush2.msra.mxu0 0.0
    %244 = vmatprep.subr.mxu0 0.0
    %245 = vmatpush2.msra.mxu0 0.0
    %246 = vmatprep.subr.mxu0 0.0
    %247 = vmatpush2.msra.mxu0 0.0
    %248 = vmatprep.subr.mxu0 0.0
    %249 = vmatpush2.msra.mxu0 0.0
    %250 = vmatprep.subr.mxu0 0.0
    %251 = vmatpush2.msra.mxu0 0.0
    %252 = vmatprep.subr.mxu0 0.0
    %253 = vmatpush2.msra.mxu0 0.0
    %254 = vmatprep.subr.mxu0 0.0
    %255 = vmatpush2.msra.mxu0 0.0
    %256 = vmatprep.subr.mxu0 0.0
    %257 = vmatpush2.msra.mxu0 0.0
    %258 = vmatprep.mubr.f32.mxu0 0.0
    %259 = vmatmul.mubr.f32.gmra.mxu0 %v188
    %v260 = vpop.f32.mrf.mxu0
    %v261 = vadd.f32 %v184, %v260
    %v262 = vpop.f32.mrf.mxu0
    %263 = vdwg.mxu0
    %264 = vst [vmem:[#allocation2] sm:$0x3] %v261
    // Predicated region
    $region22: #{tpu_custom_call.1} parent=1 // pred_check
      _
    $region23: #{tpu_custom_call.1} parent=1 // pred_check_branch
      %266 = sbr.rel (0) target = $region25
    $region24: #{tpu_custom_call.1} parent=1 // pred_region
      %s268 = ssub.s32 32, 32
      %269 = vsyncadd [#allocation3], %s268
      %s271 = sshll.u32 [#allocation2], 4
      %s272 = int_to_ptr.vmem [resolvable:$true] %s271
      %274 = dma.vmem_to_hbm [thread:$0]  %s272, 32, %s5, [#allocation3]
    $region25: #{tpu_custom_call.1} parent=1 // pred_fallthru
      _
    // Predicated region
    $region26: #{tpu_custom_call.1} parent=1 // pred_check
      _
    $region27: #{tpu_custom_call.1} parent=1 // pred_check_branch
      %276 = sbr.rel (0) target = $region29
    $region28: #{tpu_custom_call.1} parent=1 // pred_region
      %277 = dma.done [#allocation3], 32
    $region29: #{tpu_custom_call.1} parent=1 // pred_fallthru
      _
    %278 = vsyncpa [#allocation3], 1

</llo_original>
